<compile_context>
chip_gen: v6e
topology: v6e:2x2x1
jax: 0.10.0
libtpu: 0.0.40
codegen_flags: <defaults>
</compile_context>

<pallas_src>
import math
from functools import partial

import jax
import jax.numpy as jnp
from jax import lax
from jax.experimental import pallas as pl
from jax.experimental.pallas import tpu as pltpu


def _swd_kernel(mask_ref, v_ref, o_ref, *,
                base_shift, roll_amounts, compose, descending):
    """One grid step over a (TB, L, TD) block.

    Trace-time constants:
      compose=True  -> bit butterfly: selected rolls compose on the running value
      compose=False -> distinct-shift: selected rolls read the original value
    """
    tb, seq_len, td = v_ref.shape
    n_rolls = len(roll_amounts)

    # Hoisted per-grid-step constants, materialized once at slab shape so the
    # per-slab computation does not re-emit broadcasts.
    row = lax.broadcasted_iota(jnp.int32, (seq_len, td), 0)
    even = (row & 1) == 0
    masks = [
        jnp.broadcast_to(mask_ref[k:k + 1, :] != 0, (seq_len, td))
        for k in range(n_rolls)
    ]

    def compute_slab(x):
        # ---- per-channel circular shift along time ----
        y = pltpu.roll(x, base_shift, axis=0) if base_shift else x
        for m, amt in zip(masks, roll_amounts):
            src = y if compose else x
            y = jnp.where(m, pltpu.roll(src, amt, axis=0), y)
        # ---- pairwise sort of adjacent time steps (len_sort_window == 2) ----
        nxt = pltpu.roll(y, seq_len - 1, axis=0)    # nxt[t] = y[(t + 1) % L]
        prv = pltpu.roll(y, 1, axis=0)              # prv[t] = y[(t - 1) % L]
        if descending:
            return jnp.where(even, jnp.maximum(y, nxt), jnp.minimum(y, prv))
        return jnp.where(even, jnp.minimum(y, nxt), jnp.maximum(y, prv))

    def one_slab(i):
        o_ref[i] = compute_slab(v_ref[i]).astype(o_ref.dtype)

    if tb <= 4:
        # few slabs: full unroll is cheap and gives the scheduler ILP
        for i in range(tb):
            one_slab(i)
    else:
        # many slabs: a real loop bounds vreg live ranges (no cross-slab spills)
        def loop_body(i, carry):
            one_slab(i)
            return carry
        lax.fori_loop(0, tb, loop_body, 0)


def _make_shifts(v_len, d_v, layer_idx, num_layers, dim):
    """Per-channel shift offsets matching SWD_exp.get_shift_matrix (mod v_len)."""
    return [
        math.ceil(v_len ** ((layer_idx * dim + c) / (num_layers * dim))) % v_len
        for c in range(d_v)
    ]


def _plan_rolls(lane_shifts, seq_len):
    """Trace-time decomposition of per-lane circular shifts into full-slab rolls
    plus per-lane selects. Returns (base_shift, roll_amounts, mask_rows, compose)
    choosing whichever of distinct-shift / bit-butterfly needs fewer rolls."""
    uniq = sorted(set(lane_shifts))

    # Option A: one roll per distinct shift value, disjoint lane masks.
    distinct_rolls = (0 if uniq[0] == 0 else 1) + (len(uniq) - 1)

    # Option B: bit butterfly -- composed rolls of 2^j, per-lane bit masks.
    nbits = max(1, (seq_len - 1).bit_length())
    common = 0
    mixed = []
    for j in range(nbits):
        bits = [(s >> j) & 1 for s in lane_shifts]
        if all(bits):
            common |= 1 << j
        elif any(bits):
            mixed.append(j)
    butterfly_rolls = (1 if common else 0) + len(mixed)

    if distinct_rolls <= butterfly_rolls:
        base = uniq[0]
        amounts = list(uniq[1:])
        rows = [[1 if s == a else 0 for s in lane_shifts] for a in amounts]
        return base, amounts, rows, False
    rows = [[(s >> j) & 1 for s in lane_shifts] for j in mixed]
    return common, [1 << j for j in mixed], rows, True


def swd_exp_forward(v, *, layer_idx, num_layers, dim, descending=False):
    """Forward of SWD_exp (default path: padding_mask=None, src_lengths=None)."""
    B, L, D = v.shape
    assert L % 2 == 0, "len_sort_window=2 requires an even sequence length"

    shifts = _make_shifts(L, D, layer_idx, num_layers, dim)

    # ---- lane densification for small D: fold batch elements into lanes ----
    # D < 128 leaves most of every vreg lane empty and makes output stores
    # masked partial stores; folding k batch slabs into the lane axis makes the
    # block lane-dense(r) at the cost of one XLA transpose each way.
    fold = 1
    if D < 128 and B > 1:
        for cand in range(min(B, max(1, 128 // D)), 1, -1):
            if B % cand == 0:
                fold = cand
                break
    if fold > 1:
        vk = (v.reshape(B // fold, fold, L, D)
               .transpose(0, 2, 1, 3)
               .reshape(B // fold, L, fold * D))
    else:
        vk = v
    Bp, _, Dp = vk.shape
    lane_shifts = shifts * fold                     # tile per folded batch slice

    # ---- trace-time roll plan + tiny lane-select mask input ----
    base_shift, roll_amounts, mask_rows, compose = _plan_rolls(lane_shifts, L)
    n_rolls = len(roll_amounts)
    if n_rolls:
        masks = jnp.asarray(mask_rows, dtype=jnp.int32)     # (n_rolls, Dp)
    else:
        masks = jnp.zeros((1, Dp), dtype=jnp.int32)         # unused dummy
    n_mask_rows = masks.shape[0]

    # ---- tiling: as big a block as this generation's VMEM allows ----
    itemsize = jnp.dtype(v.dtype).itemsize
    # Channel tile: full Dp unless Dp is a big multiple of 128 (bounds VMEM for
    # huge D while keeping lane-dense blocks / the (8,128) rule).
    TD = 512 if (Dp > 512 and Dp % 128 == 0) else Dp

    try:
        info = pltpu.get_tpu_info()
        vmem_phys = int(getattr(info, "vmem_capacity_bytes", 64 << 20))
    except Exception:
        vmem_phys = 64 << 20                        # conservative (v7x per-core)
    vmem_limit = int(min(vmem_phys - (8 << 20), 100 << 20))   # leave headroom

    slab_f32 = L * TD * 4
    temp_bytes = 10 * slab_f32                      # conservative kernel temporaries
    block_bytes = 4 * L * TD * itemsize             # in+out, double-buffered, per slab
    block_budget = min(max(vmem_limit - temp_bytes - (4 << 20), block_bytes),
                       48 << 20)
    TB = max(1, int(block_budget // block_bytes))
    TB = min(TB, Bp)
    # Keep >= 2 grid steps when possible so v7x's two TensorCores both get work.
    if pl.cdiv(Bp, TB) * pl.cdiv(Dp, TD) < 2 and Bp > 1:
        TB = pl.cdiv(Bp, 2)

    grid = (pl.cdiv(Bp, TB), pl.cdiv(Dp, TD))

    kernel = partial(_swd_kernel,
                     base_shift=base_shift,
                     roll_amounts=tuple(roll_amounts),
                     compose=compose,
                     descending=descending)

    out = pl.pallas_call(
        kernel,
        out_shape=jax.ShapeDtypeStruct((Bp, L, Dp), v.dtype),
        grid_spec=pltpu.PrefetchScalarGridSpec(
            num_scalar_prefetch=0,
            grid=grid,
            in_specs=[
                pl.BlockSpec((n_mask_rows, TD), lambda b, d: (0, d)),   # lane masks
                pl.BlockSpec((TB, L, TD), lambda b, d: (b, 0, d)),      # v block
            ],
            out_specs=pl.BlockSpec((TB, L, TD), lambda b, d: (b, 0, d)),
        ),
        compiler_params=pltpu.CompilerParams(
            dimension_semantics=("parallel", "parallel"),
            vmem_limit_bytes=vmem_limit,
        ),
        cost_estimate=pl.CostEstimate(
            flops=Bp * L * Dp * (n_rolls + 4),
            transcendentals=0,
            bytes_accessed=2 * Bp * L * Dp * itemsize + int(masks.size) * 4,
        ),
    )(masks, vk)

    if fold > 1:
        out = (out.reshape(B // fold, L, fold, D)
                  .transpose(0, 2, 1, 3)
                  .reshape(B, L, D))
    return out


def swd_ref(v, *, layer_idx, num_layers, dim, descending=False):
    """Pure-JAX reference mirroring the PyTorch forward (no padding/src_lengths)."""
    B, L, D = v.shape
    shifts = jnp.asarray(_make_shifts(L, D, layer_idx, num_layers, dim), jnp.int32)
    t = jnp.arange(L, dtype=jnp.int32)[:, None]
    idx = (t - shifts[None, :]) % L                       # (L, D) gather indices
    idx = jnp.broadcast_to(idx[None], (B, L, D))
    v_shifted = jnp.take_along_axis(v, idx, axis=1)
    v_win = v_shifted.reshape(B, L // 2, 2, D)
    v_sorted = jnp.sort(v_win, axis=2)
    if descending:
        v_sorted = v_sorted[:, :, ::-1, :]
    return v_sorted.reshape(B, L, D)


if __name__ == "__main__":
    # (batch, v_len, d_v, layer_idx, num_layers, dim)
    tests = [
        (2, 16, 32, 1, 4, 32),       # spec shape: small-D fold, distinct-shift plan
        (4, 32, 48, 2, 4, 48),       # fold + butterfly plan, multi-step grid
        (16, 16, 256, 3, 4, 256),    # no fold, many slabs -> in-kernel fori_loop
    ]
    key = jax.random.PRNGKey(0)
    for (b, l, d, li, nl, dm) in tests:
        key, sub = jax.random.split(key)
        v = jax.random.normal(sub, (b, l, d), dtype=jnp.float32)
        for desc in (False, True):
            out = swd_exp_forward(v, layer_idx=li, num_layers=nl, dim=dm,
                                  descending=desc)
            out = jax.block_until_ready(out)
            ref = swd_ref(v, layer_idx=li, num_layers=nl, dim=dm,
                          descending=desc)
            assert out.shape == (b, l, d)
            assert jnp.array_equal(out, ref), (
                f"mismatch vs reference shape={(b, l, d)} descending={desc}")
    print("KERNEL_OK")
</pallas_src>

<mosaic_0001>
module attributes {stable_mosaic.version = 11 : i64} {
  func.func @_swd_kernel(%arg0: i32, %arg1: i32, %arg2: memref<2x64xi32, #tpu.memory_space<vmem>>, %arg3: memref<1x16x64xf32, #tpu.memory_space<vmem>>, %arg4: memref<1x16x64xf32, #tpu.memory_space<vmem>>) attributes {dimension_semantics = [#tpu.dimension_semantics<parallel>, #tpu.dimension_semantics<parallel>], iteration_bounds = array<i64: 1, 1>, scalar_prefetch = 0 : i64, scratch_operands = 0 : i64, tpu.core_type = #tpu.core_type<tc>, window_params = [{transform_indices = @transform_0, window_bounds = array<i64: 2, 64>}, {transform_indices = @transform_1, window_bounds = array<i64: 1, 16, 64>}, {transform_indices = @transform_2, window_bounds = array<i64: 1, 16, 64>}]} {
    %0 = tpu.iota {dimensions = array<i32: 0>} : vector<16x64xi32>
    %c1_i32 = arith.constant 1 : i32
    %1 = vector.broadcast %c1_i32 : i32 to vector<16x64xi32>
    %2 = arith.andi %0, %1 : vector<16x64xi32>
    %c0_i32 = arith.constant 0 : i32
    %3 = vector.broadcast %c0_i32 : i32 to vector<16x64xi32>
    %4 = arith.cmpi eq, %2, %3 : vector<16x64xi32>
    %c0 = arith.constant 0 : index
    %c0_0 = arith.constant 0 : index
    %5 = vector.load %arg2[%c0, %c0_0] : memref<2x64xi32, #tpu.memory_space<vmem>>, vector<1x64xi32>
    %c0_i32_1 = arith.constant 0 : i32
    %6 = vector.broadcast %c0_i32_1 : i32 to vector<1x64xi32>
    %7 = arith.cmpi ne, %5, %6 : vector<1x64xi32>
    %8 = vector.shape_cast %7 : vector<1x64xi1> to vector<1x64xi1>
    %9 = vector.broadcast %8 : vector<1x64xi1> to vector<16x64xi1>
    %c1 = arith.constant 1 : index
    %c0_2 = arith.constant 0 : index
    %10 = vector.load %arg2[%c1, %c0_2] : memref<2x64xi32, #tpu.memory_space<vmem>>, vector<1x64xi32>
    %c0_i32_3 = arith.constant 0 : i32
    %11 = vector.broadcast %c0_i32_3 : i32 to vector<1x64xi32>
    %12 = arith.cmpi ne, %10, %11 : vector<1x64xi32>
    %13 = vector.shape_cast %12 : vector<1x64xi1> to vector<1x64xi1>
    %14 = vector.broadcast %13 : vector<1x64xi1> to vector<16x64xi1>
    %c0_4 = arith.constant 0 : index
    %c0_5 = arith.constant 0 : index
    %c0_6 = arith.constant 0 : index
    %15 = vector.load %arg3[%c0_4, %c0_5, %c0_6] : memref<1x16x64xf32, #tpu.memory_space<vmem>>, vector<1x16x64xf32>
    %16 = vector.shape_cast %15 : vector<1x16x64xf32> to vector<16x64xf32>
    %c2_i32 = arith.constant 2 : i32
    %17 = tpu.dynamic_rotate %16 by %c2_i32 dim 0 : vector<16x64xf32>, i32 -> vector<16x64xf32>
    %c3_i32 = arith.constant 3 : i32
    %18 = tpu.dynamic_rotate %16 by %c3_i32 dim 0 : vector<16x64xf32>, i32 -> vector<16x64xf32>
    %19 = arith.select %9, %18, %17 : vector<16x64xi1>, vector<16x64xf32>
    %c4_i32 = arith.constant 4 : i32
    %20 = tpu.dynamic_rotate %16 by %c4_i32 dim 0 : vector<16x64xf32>, i32 -> vector<16x64xf32>
    %21 = arith.select %14, %20, %19 : vector<16x64xi1>, vector<16x64xf32>
    %c15_i32 = arith.constant 15 : i32
    %22 = tpu.dynamic_rotate %21 by %c15_i32 dim 0 : vector<16x64xf32>, i32 -> vector<16x64xf32>
    %c1_i32_7 = arith.constant 1 : i32
    %23 = tpu.dynamic_rotate %21 by %c1_i32_7 dim 0 : vector<16x64xf32>, i32 -> vector<16x64xf32>
    %24 = arith.minimumf %21, %22 : vector<16x64xf32>
    %25 = arith.maximumf %21, %23 : vector<16x64xf32>
    %26 = arith.select %4, %24, %25 : vector<16x64xi1>, vector<16x64xf32>
    %c0_8 = arith.constant 0 : index
    %c0_9 = arith.constant 0 : index
    %c0_10 = arith.constant 0 : index
    %27 = vector.load %arg4[%c0_8, %c0_9, %c0_10] : memref<1x16x64xf32, #tpu.memory_space<vmem>>, vector<1x16x64xf32>
    %28 = vector.shape_cast %27 : vector<1x16x64xf32> to vector<16x64xf32>
    %29 = vector.shape_cast %26 : vector<16x64xf32> to vector<1x16x64xf32>
    tpu.vector_store %arg4[%c0_8, %c0_9, %c0_10], %29 {strides = array<i32>} : memref<1x16x64xf32, #tpu.memory_space<vmem>>, vector<1x16x64xf32>,
    return
  }
  func.func @transform_0(%arg0: i32, %arg1: i32) -> (i32, i32) {
    %c0_i32 = arith.constant 0 : i32
    %c0_i32_0 = arith.constant 0 : i32
    return %c0_i32, %arg1 : i32, i32
  }
  func.func @transform_1(%arg0: i32, %arg1: i32) -> (i32, i32, i32) {
    %c0_i32 = arith.constant 0 : i32
    %c0_i32_0 = arith.constant 0 : i32
    return %arg0, %c0_i32, %arg1 : i32, i32, i32
  }
  func.func @transform_2(%arg0: i32, %arg1: i32) -> (i32, i32, i32) {
    %c0_i32 = arith.constant 0 : i32
    %c0_i32_0 = arith.constant 0 : i32
    return %arg0, %c0_i32, %arg1 : i32, i32, i32
  }
}

</mosaic_0001>

<llo_original>
// kernel: tpu_custom_call.1
$region0: #{tpu_custom_call.1}
  #allocation0 [shape = 'u32[]', space=smem, size = 0x4, offset = 0x4, fixed_abs, tag = 'smem constant byte address 0x4 - core index']
  #allocation1 [shape = 'u32[144,128]{1,0:T(1,128)}', space=vmem, size = 0x12000, scoped, tag = 'internal scratch']
  %s0 = inlined_call_operand.hbm [shape: s32[2,64], index: 0, kind: input, shape index: {}]
  %s1 = inlined_call_operand.hbm [shape: f32[1,16,64], index: 1, kind: input, shape index: {}]
  %s2 = inlined_call_operand.hbm [shape: f32[1,16,64], index: 2, kind: output, shape index: {}]
  %s3 = sld [smem:[#allocation0]]
  $region26: #{tpu_custom_call.1} parent=0
    _
  %s5 = ssub.s32 1, %s3
  %s6 = scalar_select 0, %s5, %s3
  $region1: #{tpu_custom_call.1} parent=0
    #allocation2 [shape = 'u8[1024]{0}', space=vmem, size = 0x400, scoped, tag = 'input window, operand 0, single buffered']
    #allocation3 [shape = 's32[1]{0}', space=sflag, size = 0x4, scoped, tag = 'scoped memory for tpu_custom_call.1']
    #allocation4 [shape = 's32[1]{0}', space=sflag, size = 0x4, scoped, tag = 'scoped memory for tpu_custom_call.1']
    #allocation5 [shape = 'u8[8192]{0}', space=vmem, size = 0x2000, scoped, tag = 'input window, operand 1, single buffered']
    #allocation6 [shape = 's32[1]{0}', space=sflag, size = 0x4, scoped, tag = 'scoped memory for tpu_custom_call.1']
    #allocation7 [shape = 'u8[8192]{0}', space=vmem, size = 0x2000, scoped, tag = 'output window, operand 0, single buffered']
    %7 = vsyncpa [#allocation3], 0
    %8 = vsyncpa [#allocation6], 0
    %9 = vsyncpa [#allocation4], 0
    // Predicated region
    $region2: #{tpu_custom_call.1} parent=1 // pred_check
      _
    $region3: #{tpu_custom_call.1} parent=1 // pred_check_branch
      %11 = sbr.rel (0) target = $region5
    $region4: #{tpu_custom_call.1} parent=1 // pred_region
      %s13 = ssub.s32 32, 32
      %14 = vsyncadd [#allocation3], %s13
      %s16 = sshll.u32 [#allocation2], 4
      %s17 = int_to_ptr.vmem [resolvable:$true] %s16
      %19 = dma.hbm_to_vmem [thread:$0]  %s0, 32, %s17, [#allocation3]
    $region5: #{tpu_custom_call.1} parent=1 // pred_fallthru
      _
    // Predicated region
    $region6: #{tpu_custom_call.1} parent=1 // pred_check
      _
    $region7: #{tpu_custom_call.1} parent=1 // pred_check_branch
      %21 = sbr.rel (0) target = $region9
    $region8: #{tpu_custom_call.1} parent=1 // pred_region
      %s23 = ssub.s32 256, 256
      %24 = vsyncadd [#allocation6], %s23
      %s25 = sshll.u32 [#allocation5], 4
      %s26 = int_to_ptr.vmem [resolvable:$true] %s25
      %31 = dma.hbm_to_vmem [thread:$0]  %s1, 256, %s26, [#allocation6], 128, 128, 8
    $region9: #{tpu_custom_call.1} parent=1 // pred_fallthru
      _
    // Predicated region
    $region10: #{tpu_custom_call.1} parent=1 // pred_check
      _
    $region11: #{tpu_custom_call.1} parent=1 // pred_check_branch
      %33 = sbr.rel (0) target = $region13
    $region12: #{tpu_custom_call.1} parent=1 // pred_region
      %34 = dma.done [#allocation3], 32
    $region13: #{tpu_custom_call.1} parent=1 // pred_fallthru
      _
    // Predicated region
    $region14: #{tpu_custom_call.1} parent=1 // pred_check
      _
    $region15: #{tpu_custom_call.1} parent=1 // pred_check_branch
      %36 = sbr.rel (0) target = $region17
    $region16: #{tpu_custom_call.1} parent=1 // pred_region
      %37 = dma.done [#allocation6], 256
    $region17: #{tpu_custom_call.1} parent=1 // pred_fallthru
      _
    %v38 = vlaneseq
    %v39 = vshrl.u32 %v38, 7
    %v40 = vadd.s32 %v39, 8
    %v41 = vand.u32 %v39, 1
    %v42 = vand.u32 %v40, 1
    %vm43 = vcmp.eq.s32.totalorder %v41, 0
    %vm44 = vcmp.eq.s32.totalorder %v42, 0
    %v45 = vld [vmem:[#allocation2] sm:$0x1]
    %vm46 = vcmp.ne.s32.totalorder %v45, 0
    %v47 = vsel %vm46, 1, 0
    %v48 = vlaneseq
    %v49 = vshrl.u32 %v48, 7
    %v50 = vsub.s32 0, %v49
    %v51 = vrot.slane %v47, %v50
    %vm52 = vcmp.eq.s32.totalorder %v51, 1
    %v53 = vld [vmem:[#allocation2 + $0x1] sm:$0x1]
    %vm54 = vcmp.ne.s32.totalorder %v53, 0
    %v55 = vsel %vm54, 1, 0
    %v56 = vlaneseq
    %v57 = vshrl.u32 %v56, 7
    %v58 = vsub.s32 0, %v57
    %v59 = vrot.slane %v55, %v58
    %vm60 = vcmp.eq.s32.totalorder %v59, 1
    %v61 = vld [vmem:[#allocation5] sm:$0xff]
    %v62 = vld [vmem:[#allocation5 + $0x8] sm:$0xff]
    %v63 = vrot.slane %v61, 6
    %v64 = vrot.slane %v62, 6
    %vm65 = vcmp.lt.s32.totalorder %v39, 2
    %v66 = vsel %vm65, %v63, %v64
    %v67 = vsel %vm65, %v64, %v63
    %v68 = vrot.slane %v61, 5
    %v69 = vrot.slane %v62, 5
    %vm70 = vcmp.lt.s32.totalorder %v39, 3
    %v71 = vsel %vm70, %v68, %v69
    %v72 = vsel %vm70, %v69, %v68
    %v73 = vsel %vm52, %v72, %v67
    %v74 = vsel %vm52, %v71, %v66
    %v75 = vrot.slane %v61, 4
    %v76 = vrot.slane %v62, 4
    %vm77 = vcmp.lt.s32.totalorder %v39, 4
    %v78 = vsel %vm77, %v75, %v76
    %v79 = vsel %vm77, %v76, %v75
    %v80 = vsel %vm60, %v79, %v73
    %v81 = vsel %vm60, %v78, %v74
    %v82 = vrot.slane %v80, 1
    %v83 = vrot.slane %v81, 1
    %vm84 = vcmp.lt.s32.totalorder %v39, 7
    %v85 = vsel %vm84, %v82, %v83
    %v86 = vsel %vm84, %v83, %v82
    %v87 = vrot.slane %v80, 7
    %v88 = vrot.slane %v81, 7
    %vm89 = vcmp.lt.s32.totalorder %v39, 1
    %v90 = vsel %vm89, %v87, %v88
    %v91 = vsel %vm89, %v88, %v87
    %v92 = vmin.f32 %v80, %v85
    %v93 = vmin.f32 %v81, %v86
    %v94 = vmax.f32 %v80, %v91
    %v95 = vmax.f32 %v81, %v90
    %v96 = vsel %vm43, %v92, %v94
    %v97 = vsel %vm44, %v93, %v95
    %vm98 = vcmask 523264
    %99 = vst.msk [vmem:[#allocation7] sm:$0xff] %vm98, %v96
    %100 = vst.msk [vmem:[#allocation7 + $0x8] sm:$0xff] %vm98, %v97
    // Predicated region
    $region18: #{tpu_custom_call.1} parent=1 // pred_check
      _
    $region19: #{tpu_custom_call.1} parent=1 // pred_check_branch
      %102 = sbr.rel (0) target = $region21
    $region20: #{tpu_custom_call.1} parent=1 // pred_region
      %s104 = ssub.s32 256, 256
      %105 = vsyncadd [#allocation4], %s104
      %s106 = sshll.u32 [#allocation7], 4
      %s107 = int_to_ptr.vmem [resolvable:$true] %s106
      %112 = dma.vmem_to_hbm [thread:$0]  %s107, 256, %s2, [#allocation4], 128, 128, 8
    $region21: #{tpu_custom_call.1} parent=1 // pred_fallthru
      _
    // Predicated region
    $region22: #{tpu_custom_call.1} parent=1 // pred_check
      _
    $region23: #{tpu_custom_call.1} parent=1 // pred_check_branch
      %114 = sbr.rel (0) target = $region25
    $region24: #{tpu_custom_call.1} parent=1 // pred_region
      %115 = dma.done [#allocation4], 256
    $region25: #{tpu_custom_call.1} parent=1 // pred_fallthru
      _
    %116 = vsyncpa [#allocation3], 1
    %117 = vsyncpa [#allocation6], 1
    %118 = vsyncpa [#allocation4], 1

</llo_original>
